<compile_context>
chip_gen: v7x
topology: tpu7x:2x2x1
jax: 0.10.0
libtpu: 0.0.40
codegen_flags: <defaults>
</compile_context>

<pallas_src>
import functools

import jax
import jax.numpy as jnp
from jax import lax
from jax.experimental import pallas as pl
from jax.experimental.pallas import tpu as pltpu


def edge_mlp_kernel(g_ref, w1_ref, b1_ref, w2_ref, b2_ref, out_ref):
    # Layer 0 epilogue (matmul + gather + add already folded by the wrapper):
    # ReLU on the VPU — free filler under the DMA/MXU.
    h = jnp.maximum(g_ref[...], 0.0)
    # Layer 1: (tile_e, H) @ (H, H) + (1, H) -> ReLU  (MXU, f32 accumulation).
    h = jnp.dot(h, w1_ref[...], preferred_element_type=jnp.float32) + b1_ref[...]
    h = jnp.maximum(h, 0.0)
    # Layer 2, lane-dense: w2_ref is (8, H) with the real weight row at index 0
    # (rows 1..7 zero).  A @ B^T via dot_general -> (8, tile_e); keep row 0.
    scores = lax.dot_general(
        w2_ref[...], h, (((1,), (1,)), ((), ())),
        preferred_element_type=jnp.float32)
    out_ref[...] = (scores[0:1, :] + b2_ref[0, 0]).astype(out_ref.dtype)


@functools.partial(jax.jit, static_argnames=("tile_e",))
def output_net_forward(x, start, end, params, *, tile_e=512):
    """x: (N, H) f32; start, end: (E,) int32; returns (E, 1) f32.

    tile_e should be a multiple of 256 (v6e/v7x MXU geometry; also a multiple
    of 128 for v5e).  512-4096 is a good range for production edge counts;
    VMEM is not a constraint at those sizes on any generation.
    """
    w0, b0, w1, b1, w2, b2 = params
    H = w1.shape[0]
    E = start.shape[0]

    hi = lax.Precision.HIGHEST
    # Algebraic split of layer 0: N-sized matmuls, no (E, 2H) concat.
    pa = jnp.dot(x, w0[:H], precision=hi) + b0            # (N, H)
    pb = jnp.dot(x, w0[H:], precision=hi)                 # (N, H)
    # Single fused gather+gather+add -> one (E, H) operand for the kernel
    # (one HBM writeback instead of two, one kernel-side stream instead of two).
    g = pa[start] + pb[end]                               # (E, H)

    n_tiles = pl.cdiv(E, tile_e)
    e_pad = n_tiles * tile_e
    if e_pad != E:
        g = jnp.pad(g, ((0, e_pad - E), (0, 0)))

    # Final-layer weight as an 8-row LHS (row 0 = w2^T, rest zero) and b2 as an
    # SMEM scalar.
    w2_row8 = jnp.zeros((8, H), w2.dtype).at[0, :].set(w2[:, 0])
    b2_smem = jnp.reshape(b2, (1, 1)).astype(jnp.float32)

    const = lambda i: (0, 0)
    out2d = pl.pallas_call(
        edge_mlp_kernel,
        out_shape=jax.ShapeDtypeStruct((1, e_pad), jnp.float32),
        grid_spec=pltpu.PrefetchScalarGridSpec(
            num_scalar_prefetch=0,
            grid=(n_tiles,),
            in_specs=[
                pl.BlockSpec((tile_e, H), lambda i: (i, 0)),        # g
                pl.BlockSpec((H, H), const),                        # w1
                pl.BlockSpec((1, H), const),                        # b1
                pl.BlockSpec((8, H), const),                        # w2 (8, H)
                pl.BlockSpec(memory_space=pltpu.MemorySpace.SMEM),  # b2 scalar
            ],
            out_specs=pl.BlockSpec((1, tile_e), lambda i: (0, i)),  # lane-dense
        ),
        compiler_params=pltpu.CompilerParams(
            dimension_semantics=("parallel",)),
    )(g, w1, b1, w2_row8, b2_smem)

    return out2d[0, :E].reshape(E, 1)


def reference_forward(x, start, end, params):
    w0, b0, w1, b1, w2, b2 = params
    hi = lax.Precision.HIGHEST
    ei = jnp.concatenate([x[start], x[end]], axis=1)
    h = jnp.maximum(jnp.dot(ei, w0, precision=hi) + b0, 0.0)
    h = jnp.maximum(jnp.dot(h, w1, precision=hi) + b1, 0.0)
    return jnp.dot(h, w2, precision=hi) + b2


if __name__ == "__main__":
    # nodes, hidden size, edges (E deliberately NOT a multiple of tile_e so the
    # padded / multi-tile path is exercised).
    N, H, E = 64, 32, 300

    key = jax.random.PRNGKey(0)
    kx, ks, ke, k0, k1, k2 = jax.random.split(key, 6)

    x = jax.random.normal(kx, (N, H), dtype=jnp.float32)
    start = jax.random.randint(ks, (E,), 0, N, dtype=jnp.int32)
    end = jax.random.randint(ke, (E,), 0, N, dtype=jnp.int32)

    # Deterministic edge_network parameters (Linear weights stored as
    # (in, out) so the math is x @ W + b).
    scale = 0.1
    w0 = scale * jax.random.normal(k0, (2 * H, H), dtype=jnp.float32)
    b0 = jnp.zeros((1, H), dtype=jnp.float32)
    w1 = scale * jax.random.normal(k1, (H, H), dtype=jnp.float32)
    b1 = jnp.full((1, H), 0.01, dtype=jnp.float32)
    w2 = scale * jax.random.normal(k2, (H, 1), dtype=jnp.float32)
    b2 = jnp.full((1, 1), -0.05, dtype=jnp.float32)
    params = (w0, b0, w1, b1, w2, b2)

    # tile_e=256 here so the E=300 test exercises the multi-tile + padding path.
    out = output_net_forward(x, start, end, params, tile_e=256)
    out = jax.block_until_ready(out)

    ref = reference_forward(x, start, end, params)
    assert out.shape == (E, 1)
    assert jnp.allclose(out, ref, atol=1e-4, rtol=1e-4), "mismatch vs reference"

    print("KERNEL_OK")
</pallas_src>

<mosaic_0001>
module attributes {stable_mosaic.version = 11 : i64} {
  func.func @edge_mlp_kernel(%arg0: i32, %arg1: memref<256x32xf32, #tpu.memory_space<vmem>>, %arg2: memref<32x32xf32, #tpu.memory_space<vmem>>, %arg3: memref<1x32xf32, #tpu.memory_space<vmem>>, %arg4: memref<8x32xf32, #tpu.memory_space<vmem>>, %arg5: memref<1x1xf32, #tpu.memory_space<smem>>, %arg6: memref<1x256xf32, #tpu.memory_space<vmem>>) attributes {dimension_semantics = [#tpu.dimension_semantics<parallel>], iteration_bounds = array<i64: 2>, scalar_prefetch = 0 : i64, scratch_operands = 0 : i64, tpu.core_type = #tpu.core_type<tc>, window_params = [{transform_indices = @transform_0, window_bounds = array<i64: 256, 32>}, {pipeline_mode = #tpu.pipeline_mode<synchronous>, transform_indices = @transform_1, window_bounds = array<i64: 32, 32>}, {pipeline_mode = #tpu.pipeline_mode<synchronous>, transform_indices = @transform_2, window_bounds = array<i64: 1, 32>}, {pipeline_mode = #tpu.pipeline_mode<synchronous>, transform_indices = @transform_3, window_bounds = array<i64: 8, 32>}, {transform_indices = @transform_4, window_bounds = array<i64: 1, 1>}, {transform_indices = @transform_5, window_bounds = array<i64: 1, 256>}]} {
    %c0 = arith.constant 0 : index
    %c0_0 = arith.constant 0 : index
    %0 = vector.load %arg1[%c0, %c0_0] : memref<256x32xf32, #tpu.memory_space<vmem>>, vector<256x32xf32>
    %cst = arith.constant 0.000000e+00 : f32
    %1 = vector.broadcast %cst : f32 to vector<256x32xf32>
    %2 = arith.maximumf %0, %1 : vector<256x32xf32>
    %c0_1 = arith.constant 0 : index
    %c0_2 = arith.constant 0 : index
    %3 = vector.load %arg2[%c0_1, %c0_2] : memref<32x32xf32, #tpu.memory_space<vmem>>, vector<32x32xf32>
    %cst_3 = arith.constant dense<0.000000e+00> : vector<256x32xf32>
    %4 = tpu.matmul %2, %3, %cst_3 {dimension_numbers = #tpu.dot_dimension_numbers<[1], [0], [0], [1], [0, 0, 1, 1], [], []>} : vector<256x32xf32>, vector<32x32xf32>, vector<256x32xf32> -> vector<256x32xf32>
    %c0_4 = arith.constant 0 : index
    %c0_5 = arith.constant 0 : index
    %5 = vector.load %arg3[%c0_4, %c0_5] : memref<1x32xf32, #tpu.memory_space<vmem>>, vector<1x32xf32>
    %6 = vector.broadcast %5 : vector<1x32xf32> to vector<256x32xf32>
    %7 = arith.addf %4, %6 : vector<256x32xf32>
    %cst_6 = arith.constant 0.000000e+00 : f32
    %8 = vector.broadcast %cst_6 : f32 to vector<256x32xf32>
    %9 = arith.maximumf %7, %8 : vector<256x32xf32>
    %c0_7 = arith.constant 0 : index
    %c0_8 = arith.constant 0 : index
    %10 = vector.load %arg4[%c0_7, %c0_8] : memref<8x32xf32, #tpu.memory_space<vmem>>, vector<8x32xf32>
    %cst_9 = arith.constant dense<0.000000e+00> : vector<8x256xf32>
    %11 = tpu.matmul %10, %9, %cst_9 {dimension_numbers = #tpu.dot_dimension_numbers<[1], [1], [0], [0], [0, 0, 1, 0], [], []>} : vector<8x32xf32>, vector<256x32xf32>, vector<8x256xf32> -> vector<8x256xf32>
    %12 = vector.extract_strided_slice %11 {offsets = [0, 0], sizes = [1, 256], strides = [1, 1]} : vector<8x256xf32> to vector<1x256xf32>
    %c0_10 = arith.constant 0 : index
    %c0_11 = arith.constant 0 : index
    %13 = memref.load %arg5[%c0_10, %c0_11] : memref<1x1xf32, #tpu.memory_space<smem>>
    %14 = vector.broadcast %13 : f32 to vector<1x256xf32>
    %15 = arith.addf %12, %14 : vector<1x256xf32>
    %c0_12 = arith.constant 0 : index
    %c0_13 = arith.constant 0 : index
    %16 = vector.load %arg6[%c0_12, %c0_13] : memref<1x256xf32, #tpu.memory_space<vmem>>, vector<1x256xf32>
    tpu.vector_store %arg6[%c0_12, %c0_13], %15 {strides = array<i32>} : memref<1x256xf32, #tpu.memory_space<vmem>>, vector<1x256xf32>,
    return
  }
  func.func @transform_0(%arg0: i32) -> (i32, i32) {
    %c0_i32 = arith.constant 0 : i32
    %c0_i32_0 = arith.constant 0 : i32
    return %arg0, %c0_i32 : i32, i32
  }
  func.func @transform_1(%arg0: i32) -> (i32, i32) {
    %c0_i32 = arith.constant 0 : i32
    %c0_i32_0 = arith.constant 0 : i32
    %c0_i32_1 = arith.constant 0 : i32
    return %c0_i32, %c0_i32_0 : i32, i32
  }
  func.func @transform_2(%arg0: i32) -> (i32, i32) {
    %c0_i32 = arith.constant 0 : i32
    %c0_i32_0 = arith.constant 0 : i32
    %c0_i32_1 = arith.constant 0 : i32
    return %c0_i32, %c0_i32_0 : i32, i32
  }
  func.func @transform_3(%arg0: i32) -> (i32, i32) {
    %c0_i32 = arith.constant 0 : i32
    %c0_i32_0 = arith.constant 0 : i32
    %c0_i32_1 = arith.constant 0 : i32
    return %c0_i32, %c0_i32_0 : i32, i32
  }
  func.func @transform_4(%arg0: i32) -> (i32, i32) {
    %c0_i32 = arith.constant 0 : i32
    %c0_i32_0 = arith.constant 0 : i32
    %c0_i32_1 = arith.constant 0 : i32
    return %c0_i32, %c0_i32_0 : i32, i32
  }
  func.func @transform_5(%arg0: i32) -> (i32, i32) {
    %c0_i32 = arith.constant 0 : i32
    %c0_i32_0 = arith.constant 0 : i32
    return %c0_i32, %arg0 : i32, i32
  }
}

</mosaic_0001>

<llo_original>
// kernel: output_net_forward.1
$region0: #{output_net_forward.1}
  #allocation0 [shape = 'u32[]', space=smem, size = 0x4, offset = 0x4, fixed_abs, tag = 'smem constant byte address 0x4 - core index']
  #allocation1 [shape = 'u32[144,128]{1,0:T(1,128)}', space=vmem, size = 0x12000, scoped, tag = 'internal scratch']
  #allocation2 [shape = 'f32[1,1]{1,0:T(1,128)S(6)}', space=smem, size = 0x200, scoped, tag = 'scoped memory for output_net_forward.1']
  %s0 = inlined_call_operand.vmem [shape: f32[512,32], index: 0, kind: input, shape index: {}]
  %s1 = inlined_call_operand.vmem [shape: f32[32,32], index: 1, kind: input, shape index: {}]
  %s2 = inlined_call_operand.vmem [shape: f32[1,32], index: 2, kind: input, shape index: {}]
  %s3 = inlined_call_operand.vmem [shape: f32[8,32], index: 3, kind: input, shape index: {}]
  %s4 = inlined_call_operand.<no memory space> [shape: f32[1,1], index: 4, kind: input, shape index: {}]
  %s5 = inlined_call_operand.vmem [shape: f32[1,512], index: 5, kind: output, shape index: {}]
  %s6 = sld [smem:[#allocation0]]
  $region53: #{output_net_forward.1} parent=0
    _
  %s8 = ssub.s32 1, %s6
  %s9 = scalar_select 0, %s8, %s6
  %10 = sst [smem:[#allocation2]] %s4
  loop: start=0, step=1, limit=4
  $region2: #{output_net_forward.1} parent=0 // loop_pre_header
    _
  $region3: #{output_net_forward.1} parent=0 // loop_header
    %s12 = sphi 0, %s16
    %p13 = scmp.ge.s32.totalorder %s12, 4
    %s22 = sphi 0, %s24
    %s25 = sphi 0, %s22
    %s26 = sphi 0, %s25
    %s42 = sphi 0, %s26
    %s46 = sphi 0, %s46
    %s48 = sphi 0, %s46
    %s49 = sphi 0, %s48
    %s63 = sphi 0, %s49
    %s67 = sphi 0, %s67
    %s69 = sphi 0, %s67
    %s70 = sphi 0, %s69
    %s84 = sphi 0, %s70
    %s88 = sphi 0, %s88
    %s90 = sphi 0, %s88
    %s91 = sphi 0, %s90
    %s105 = sphi 0, %s91
    %s109 = sphi 0, %s109
    %s111 = sphi 0, %s109
    %s112 = sphi 0, %s111
    %s126 = sphi 0, %s112
    %s132 = sphi 0, %s134
    %s135 = sphi 0, %s132
    %s136 = sphi 0, %s135
    %s152 = sphi 0, %s136
  $region4: #{output_net_forward.1} parent=0 // loop_header_branch
    %15 = sbr.rel (%p13) target = $region8
  $region5: #{output_net_forward.1} parent=0 // loop_body
    %s17 = ssub.s32 %s12, 1
    %s18 = ssub.s32 %s12, 2
    %s19 = sadd.s32 %s12, 1
    %s20 = ssub.s32 %s12, %s19
    %p21 = scmp.eq.s32.totalorder %s20, 0
    %s23 = sadd.s32 %s22, 1
    %s24 = scalar_select %p21, %s22, %s23
    %p27 = pneg %p21
    %p28 = scmp.eq.s32.totalorder %s12, 1
    %p29 = por %p27, %p28
    %p30 = scmp.ne.s32.totalorder %s22, %s25
    %p31 = scmp.eq.s32.totalorder %s12, 0
    %p32 = por %p30, %p31
    %p33 = scmp.ne.s32.totalorder %s22, %s25
    %p34 = scmp.eq.s32.totalorder %s17, 1
    %p35 = por %p33, %p34
    %p36 = scmp.ne.s32.totalorder %s25, %s26
    %p37 = scmp.eq.s32.totalorder %s17, 0
    %p38 = por %p36, %p37
    %p39 = scmp.ne.s32.totalorder %s25, %s26
    %p40 = scmp.eq.s32.totalorder %s18, 1
    %p41 = por %p39, %p40
    %p43 = scmp.ne.s32.totalorder %s26, %s42
    %p44 = scmp.eq.s32.totalorder %s18, 0
    %p45 = por %p43, %p44
    %s47 = sadd.s32 %s46, 1
    %p50 = scmp.eq.s32.totalorder %s12, 1
    %p51 = scmp.ne.s32.totalorder %s46, %s48
    %p52 = scmp.eq.s32.totalorder %s12, 0
    %p53 = por %p51, %p52
    %p54 = scmp.ne.s32.totalorder %s46, %s48
    %p55 = scmp.eq.s32.totalorder %s17, 1
    %p56 = por %p54, %p55
    %p57 = scmp.ne.s32.totalorder %s48, %s49
    %p58 = scmp.eq.s32.totalorder %s17, 0
    %p59 = por %p57, %p58
    %p60 = scmp.ne.s32.totalorder %s48, %s49
    %p61 = scmp.eq.s32.totalorder %s18, 1
    %p62 = por %p60, %p61
    %p64 = scmp.ne.s32.totalorder %s49, %s63
    %p65 = scmp.eq.s32.totalorder %s18, 0
    %p66 = por %p64, %p65
    %s68 = sadd.s32 %s67, 1
    %p71 = scmp.eq.s32.totalorder %s12, 1
    %p72 = scmp.ne.s32.totalorder %s67, %s69
    %p73 = scmp.eq.s32.totalorder %s12, 0
    %p74 = por %p72, %p73
    %p75 = scmp.ne.s32.totalorder %s67, %s69
    %p76 = scmp.eq.s32.totalorder %s17, 1
    %p77 = por %p75, %p76
    %p78 = scmp.ne.s32.totalorder %s69, %s70
    %p79 = scmp.eq.s32.totalorder %s17, 0
    %p80 = por %p78, %p79
    %p81 = scmp.ne.s32.totalorder %s69, %s70
    %p82 = scmp.eq.s32.totalorder %s18, 1
    %p83 = por %p81, %p82
    %p85 = scmp.ne.s32.totalorder %s70, %s84
    %p86 = scmp.eq.s32.totalorder %s18, 0
    %p87 = por %p85, %p86
    %s89 = sadd.s32 %s88, 1
    %p92 = scmp.eq.s32.totalorder %s12, 1
    %p93 = scmp.ne.s32.totalorder %s88, %s90
    %p94 = scmp.eq.s32.totalorder %s12, 0
    %p95 = por %p93, %p94
    %p96 = scmp.ne.s32.totalorder %s88, %s90
    %p97 = scmp.eq.s32.totalorder %s17, 1
    %p98 = por %p96, %p97
    %p99 = scmp.ne.s32.totalorder %s90, %s91
    %p100 = scmp.eq.s32.totalorder %s17, 0
    %p101 = por %p99, %p100
    %p102 = scmp.ne.s32.totalorder %s90, %s91
    %p103 = scmp.eq.s32.totalorder %s18, 1
    %p104 = por %p102, %p103
    %p106 = scmp.ne.s32.totalorder %s91, %s105
    %p107 = scmp.eq.s32.totalorder %s18, 0
    %p108 = por %p106, %p107
    %s110 = sadd.s32 %s109, 1
    %p113 = scmp.eq.s32.totalorder %s12, 1
    %p114 = scmp.ne.s32.totalorder %s109, %s111
    %p115 = scmp.eq.s32.totalorder %s12, 0
    %p116 = por %p114, %p115
    %p117 = scmp.ne.s32.totalorder %s109, %s111
    %p118 = scmp.eq.s32.totalorder %s17, 1
    %p119 = por %p117, %p118
    %p120 = scmp.ne.s32.totalorder %s111, %s112
    %p121 = scmp.eq.s32.totalorder %s17, 0
    %p122 = por %p120, %p121
    %p123 = scmp.ne.s32.totalorder %s111, %s112
    %p124 = scmp.eq.s32.totalorder %s18, 1
    %p125 = por %p123, %p124
    %p127 = scmp.ne.s32.totalorder %s112, %s126
    %p128 = scmp.eq.s32.totalorder %s18, 0
    %p129 = por %p127, %p128
    %s130 = ssub.s32 %s12, %s19
    %p131 = scmp.eq.s32.totalorder %s130, 0
    %s133 = sadd.s32 %s132, 1
    %s134 = scalar_select %p131, %s132, %s133
    %p137 = pneg %p131
    %p138 = scmp.eq.s32.totalorder %s12, 1
    %p139 = por %p137, %p138
    %p140 = scmp.ne.s32.totalorder %s132, %s135
    %p141 = scmp.eq.s32.totalorder %s12, 0
    %p142 = por %p140, %p141
    %p143 = scmp.ne.s32.totalorder %s132, %s135
    %p144 = scmp.eq.s32.totalorder %s17, 1
    %p145 = por %p143, %p144
    %p146 = scmp.ne.s32.totalorder %s135, %s136
    %p147 = scmp.eq.s32.totalorder %s17, 0
    %p148 = por %p146, %p147
    %p149 = scmp.ne.s32.totalorder %s135, %s136
    %p150 = scmp.eq.s32.totalorder %s18, 1
    %p151 = por %p149, %p150
    %p153 = scmp.ne.s32.totalorder %s136, %s152
    %p154 = scmp.eq.s32.totalorder %s18, 0
    %p155 = por %p153, %p154
    %p156 = scmp.le.s32.totalorder 1, %s12
    %p157 = scmp.lt.s32.totalorder %s12, 3
    %p158 = pnand %p156, %p157
    %p159 = pneg %p158
    // Predicated region
    $region9: #{output_net_forward.1} parent=5 // pred_check
      _
    $region10: #{output_net_forward.1} parent=5 // pred_check_branch
      %161 = sbr.rel (%p158) target = $region12
    $region11: #{output_net_forward.1} parent=5 // pred_region
      %s162 = ssub.s32 %s12, 1
      // Predicated region
      $region13: #{output_net_forward.1} parent=11 // pred_check
        %p163 = pneg %p59
      $region14: #{output_net_forward.1} parent=11 // pred_check_branch
        %165 = sbr.rel (%p163) target = $region16
      $region15: #{output_net_forward.1} parent=11 // pred_region
        _
      $region16: #{output_net_forward.1} parent=11 // pred_fallthru
        _
      // Predicated region
      $region17: #{output_net_forward.1} parent=11 // pred_check
        %p166 = pneg %p80
      $region18: #{output_net_forward.1} parent=11 // pred_check_branch
        %168 = sbr.rel (%p166) target = $region20
      $region19: #{output_net_forward.1} parent=11 // pred_region
        _
      $region20: #{output_net_forward.1} parent=11 // pred_fallthru
        _
      // Predicated region
      $region21: #{output_net_forward.1} parent=11 // pred_check
        %p169 = pneg %p101
      $region22: #{output_net_forward.1} parent=11 // pred_check_branch
        %171 = sbr.rel (%p169) target = $region24
      $region23: #{output_net_forward.1} parent=11 // pred_region
        _
      $region24: #{output_net_forward.1} parent=11 // pred_fallthru
        _
      // Predicated region
      $region25: #{output_net_forward.1} parent=11 // pred_check
        %p172 = pneg %p122
      $region26: #{output_net_forward.1} parent=11 // pred_check_branch
        %174 = sbr.rel (%p172) target = $region28
      $region27: #{output_net_forward.1} parent=11 // pred_region
        _
      $region28: #{output_net_forward.1} parent=11 // pred_fallthru
        _
    $region12: #{output_net_forward.1} parent=5 // pred_fallthru
      _
    %p175 = scmp.lt.s32.totalorder %s12, 2
    // Predicated region
    $region29: #{output_net_forward.1} parent=5 // pred_check
      %p176 = pneg %p175
    $region30: #{output_net_forward.1} parent=5 // pred_check_branch
      %178 = sbr.rel (%p176) target = $region32
    $region31: #{output_net_forward.1} parent=5 // pred_region
      // Predicated region
      $region33: #{output_net_forward.1} parent=31 // pred_check
        %p179 = pneg %p32
      $region34: #{output_net_forward.1} parent=31 // pred_check_branch
        %181 = sbr.rel (%p179) target = $region36
      $region35: #{output_net_forward.1} parent=31 // pred_region
        %s182 = smul.u32 32, %s12
        %p183 = scmp.lt.s32.totalorder %s182, 63
        %s184 = scalar_select %p183, %s182, 63
        %s185 = smul.addr %s184, 8
        %s186 = scalar_lea.vmem %s0, %s185
        %s187 = smul.u32 32, %s12
      $region36: #{output_net_forward.1} parent=31 // pred_fallthru
        _
    $region32: #{output_net_forward.1} parent=5 // pred_fallthru
      _
    %p188 = scmp.le.s32.totalorder 1, %s12
    %p189 = scmp.lt.s32.totalorder %s12, 3
    %p190 = pnand %p188, %p189
    %p191 = pneg %p190
    // Predicated region
    $region37: #{output_net_forward.1} parent=5 // pred_check
      _
    $region38: #{output_net_forward.1} parent=5 // pred_check_branch
      %193 = sbr.rel (%p190) target = $region40
    $region39: #{output_net_forward.1} parent=5 // pred_region
      %s194 = ssub.s32 %s12, 1
      %s195 = smul.u32 32, %s17
      %p196 = scmp.lt.s32.totalorder %s195, 63
      %s197 = scalar_select %p196, %s195, 63
      %s198 = smul.addr %s197, 8
      %s199 = scalar_lea.vmem %s0, %s198
      %p200 = pneg %p38
      %p201 = pneg %p35
      %p202 = pneg %p59
      %p203 = pneg %p56
      %p204 = pneg %p80
      %p205 = pneg %p77
      %p206 = pneg %p101
      %p207 = pneg %p98
      %p208 = pneg %p122
      %p209 = pneg %p119
      %p210 = pneg %p148
      %p211 = pneg %p145
      %s212 = smul.u32 2, %s17
      %p213 = scmp.lt.s32.totalorder %s212, 3
      %s214 = scalar_select %p213, %s212, 3
      %s215 = scalar_lea.vmem %s5, %s214
      %s216 = smul.u32 32, %s17
      %p217 = scmp.lt.s32.totalorder %s216, 63
      %s218 = scalar_select %p217, %s216, 63
      %s219 = smul.addr %s218, 8
      %s220 = scalar_lea.vmem %s0, %s219
      %s221 = smul.u32 32, %s17
      %s222 = smul.u32 2, %s17
      %p223 = scmp.lt.s32.totalorder %s222, 3
      %s224 = scalar_select %p223, %s222, 3
      %s225 = scalar_lea.vmem %s5, %s224
      %s226 = smul.u32 2, %s17
      %v227 = vld [vmem:[%s220] sm:$0xff]
      %v228 = vld [vmem:[%s220 + $0x8] sm:$0xff]
      %v229 = vld [vmem:[%s220 + $0x10] sm:$0xff]
      %v230 = vld [vmem:[%s220 + $0x18] sm:$0xff]
      %v231 = vld [vmem:[%s220 + $0x20] sm:$0xff]
      %v232 = vld [vmem:[%s220 + $0x28] sm:$0xff]
      %v233 = vld [vmem:[%s220 + $0x30] sm:$0xff]
      %v234 = vld [vmem:[%s220 + $0x38] sm:$0xff]
      %v235 = vld [vmem:[%s220 + $0x40] sm:$0xff]
      %v236 = vld [vmem:[%s220 + $0x48] sm:$0xff]
      %v237 = vld [vmem:[%s220 + $0x50] sm:$0xff]
      %v238 = vld [vmem:[%s220 + $0x58] sm:$0xff]
      %v239 = vld [vmem:[%s220 + $0x60] sm:$0xff]
      %v240 = vld [vmem:[%s220 + $0x68] sm:$0xff]
      %v241 = vld [vmem:[%s220 + $0x70] sm:$0xff]
      %v242 = vld [vmem:[%s220 + $0x78] sm:$0xff]
      %v243 = vld [vmem:[%s220 + $0x80] sm:$0xff]
      %v244 = vld [vmem:[%s220 + $0x88] sm:$0xff]
      %v245 = vld [vmem:[%s220 + $0x90] sm:$0xff]
      %v246 = vld [vmem:[%s220 + $0x98] sm:$0xff]
      %v247 = vld [vmem:[%s220 + $0xa0] sm:$0xff]
      %v248 = vld [vmem:[%s220 + $0xa8] sm:$0xff]
      %v249 = vld [vmem:[%s220 + $0xb0] sm:$0xff]
      %v250 = vld [vmem:[%s220 + $0xb8] sm:$0xff]
      %v251 = vld [vmem:[%s220 + $0xc0] sm:$0xff]
      %v252 = vld [vmem:[%s220 + $0xc8] sm:$0xff]
      %v253 = vld [vmem:[%s220 + $0xd0] sm:$0xff]
      %v254 = vld [vmem:[%s220 + $0xd8] sm:$0xff]
      %v255 = vld [vmem:[%s220 + $0xe0] sm:$0xff]
      %v256 = vld [vmem:[%s220 + $0xe8] sm:$0xff]
      %v257 = vld [vmem:[%s220 + $0xf0] sm:$0xff]
      %v258 = vld [vmem:[%s220 + $0xf8] sm:$0xff]
      %v259 = vmax.f32 %v227, 0.0
      %v260 = vmax.f32 %v228, 0.0
      %v261 = vmax.f32 %v229, 0.0
      %v262 = vmax.f32 %v230, 0.0
      %v263 = vmax.f32 %v231, 0.0
      %v264 = vmax.f32 %v232, 0.0
      %v265 = vmax.f32 %v233, 0.0
      %v266 = vmax.f32 %v234, 0.0
      %v267 = vmax.f32 %v235, 0.0
      %v268 = vmax.f32 %v236, 0.0
      %v269 = vmax.f32 %v237, 0.0
      %v270 = vmax.f32 %v238, 0.0
      %v271 = vmax.f32 %v239, 0.0
      %v272 = vmax.f32 %v240, 0.0
      %v273 = vmax.f32 %v241, 0.0
      %v274 = vmax.f32 %v242, 0.0
      %v275 = vmax.f32 %v243, 0.0
      %v276 = vmax.f32 %v244, 0.0
      %v277 = vmax.f32 %v245, 0.0
      %v278 = vmax.f32 %v246, 0.0
      %v279 = vmax.f32 %v247, 0.0
      %v280 = vmax.f32 %v248, 0.0
      %v281 = vmax.f32 %v249, 0.0
      %v282 = vmax.f32 %v250, 0.0
      %v283 = vmax.f32 %v251, 0.0
      %v284 = vmax.f32 %v252, 0.0
      %v285 = vmax.f32 %v253, 0.0
      %v286 = vmax.f32 %v254, 0.0
      %v287 = vmax.f32 %v255, 0.0
      %v288 = vmax.f32 %v256, 0.0
      %v289 = vmax.f32 %v257, 0.0
      %v290 = vmax.f32 %v258, 0.0
      %v291 = vld [vmem:[%s1] sm:$0xff]
      %v292 = vld [vmem:[%s1 + $0x8] sm:$0xff]
      %v293 = vld [vmem:[%s1 + $0x10] sm:$0xff]
      %v294 = vld [vmem:[%s1 + $0x18] sm:$0xff]
      %v295 = vld [vmem:[%s2] sm:$0x1]
      %v297 = vlaneseq
      %v298 = vshrl.u32 %v297, 7
      %v299 = vsub.s32 0, %v298
      %v300 = vrot.slane %v295, %v299
      %vm302 = vcmask 261120
      %v304 = vsel %vm302, %v259, 0
      %v307 = vsel %vm302, %v260, 0
      %v310 = vsel %vm302, %v261, 0
      %v313 = vsel %vm302, %v262, 0
      %v316 = vsel %vm302, %v263, 0
      %v319 = vsel %vm302, %v264, 0
      %v322 = vsel %vm302, %v265, 0
      %v325 = vsel %vm302, %v266, 0
      %v328 = vsel %vm302, %v267, 0
      %v331 = vsel %vm302, %v268, 0
      %v334 = vsel %vm302, %v269, 0
      %v337 = vsel %vm302, %v270, 0
      %v340 = vsel %vm302, %v271, 0
      %v343 = vsel %vm302, %v272, 0
      %v346 = vsel %vm302, %v273, 0
      %v349 = vsel %vm302, %v274, 0
      %v352 = vsel %vm302, %v275, 0
      %v355 = vsel %vm302, %v276, 0
      %v358 = vsel %vm302, %v277, 0
      %v361 = vsel %vm302, %v278, 0
      %v364 = vsel %vm302, %v279, 0
      %v367 = vsel %vm302, %v280, 0
      %v370 = vsel %vm302, %v281, 0
      %v373 = vsel %vm302, %v282, 0
      %v376 = vsel %vm302, %v283, 0
      %v379 = vsel %vm302, %v284, 0
      %v382 = vsel %vm302, %v285, 0
      %v385 = vsel %vm302, %v286, 0
      %v388 = vsel %vm302, %v287, 0
      %v391 = vsel %vm302, %v288, 0
      %v394 = vsel %vm302, %v289, 0
      %v397 = vsel %vm302, %v290, 0
      %399 = vmatprep.subr.mxu0 0.0
      %400 = vmatpush1.msra.mxu0 %v291
      %401 = vmatprep.subr.mxu0 0.0
      %402 = vmatpush1.msra.mxu0 %v292
      %403 = vmatprep.subr.mxu0 0.0
      %404 = vmatpush1.msra.mxu0 %v293
      %405 = vmatprep.subr.mxu0 0.0
      %406 = vmatpush1.msra.mxu0 %v294
      %407 = vmatprep.subr.mxu0 0.0
      %408 = vmatpush1.msra.mxu0 0.0
      %409 = vmatprep.subr.mxu0 0.0
      %410 = vmatpush1.msra.mxu0 0.0
      %411 = vmatprep.subr.mxu0 0.0
      %412 = vmatpush1.msra.mxu0 0.0
      %413 = vmatprep.subr.mxu0 0.0
      %414 = vmatpush1.msra.mxu0 0.0
      %415 = vmatprep.subr.mxu0 0.0
      %416 = vmatpush1.msra.mxu0 0.0
      %417 = vmatprep.subr.mxu0 0.0
      %418 = vmatpush1.msra.mxu0 0.0
      %419 = vmatprep.subr.mxu0 0.0
      %420 = vmatpush1.msra.mxu0 0.0
      %421 = vmatprep.subr.mxu0 0.0
      %422 = vmatpush1.msra.mxu0 0.0
      %423 = vmatprep.subr.mxu0 0.0
      %424 = vmatpush1.msra.mxu0 0.0
      %425 = vmatprep.subr.mxu0 0.0
      %426 = vmatpush1.msra.mxu0 0.0
      %427 = vmatprep.subr.mxu0 0.0
      %428 = vmatpush1.msra.mxu0 0.0
      %429 = vmatprep.subr.mxu0 0.0
      %430 = vmatpush1.msra.mxu0 0.0
      %431 = vmatprep.subr.mxu0 0.0
      %432 = vmatpush1.msra.mxu0 0.0
      %433 = vmatprep.subr.mxu0 0.0
      %434 = vmatpush1.msra.mxu0 0.0
      %435 = vmatprep.subr.mxu0 0.0
      %436 = vmatpush1.msra.mxu0 0.0
      %437 = vmatprep.subr.mxu0 0.0
      %438 = vmatpush1.msra.mxu0 0.0
      %439 = vmatprep.subr.mxu0 0.0
      %440 = vmatpush1.msra.mxu0 0.0
      %441 = vmatprep.subr.mxu0 0.0
      %442 = vmatpush1.msra.mxu0 0.0
      %443 = vmatprep.subr.mxu0 0.0
      %444 = vmatpush1.msra.mxu0 0.0
      %445 = vmatprep.subr.mxu0 0.0
      %446 = vmatpush1.msra.mxu0 0.0
      %447 = vmatprep.subr.mxu0 0.0
      %448 = vmatpush1.msra.mxu0 0.0
      %449 = vmatprep.subr.mxu0 0.0
      %450 = vmatpush1.msra.mxu0 0.0
      %451 = vmatprep.subr.mxu0 0.0
      %452 = vmatpush1.msra.mxu0 0.0
      %453 = vmatprep.subr.mxu0 0.0
      %454 = vmatpush1.msra.mxu0 0.0
      %455 = vmatprep.subr.mxu0 0.0
      %456 = vmatpush1.msra.mxu0 0.0
      %457 = vmatprep.subr.mxu0 0.0
      %458 = vmatpush1.msra.mxu0 0.0
      %459 = vmatprep.subr.mxu0 0.0
      %460 = vmatpush1.msra.mxu0 0.0
      %461 = vmatprep.subr.mxu0 0.0
      %462 = vmatpush1.msra.mxu0 0.0
      %463 = vmatprep.mubr.f32.mxu0 0.0
      %464 = vmatmul.mubr.f32.gmra.mrb[0].mxu0 %v304
      %v465 = vpop.f32.mrb[0].mxu0
      %v466 = vadd.f32 %v300, %v465
      %v467 = vpop.f32.mrb[0].mxu0
      %468 = vmatprep.mubr.f32.mxu0 0.0
      %469 = vmatmul.mubr.f32.gmra.mrb[0].mxu0 %v307
      %v470 = vpop.f32.mrb[0].mxu0
      %v471 = vadd.f32 %v300, %v470
      %v472 = vpop.f32.mrb[0].mxu0
      %473 = vmatprep.mubr.f32.mxu0 0.0
      %474 = vmatmul.mubr.f32.gmra.mrb[0].mxu0 %v310
      %v475 = vpop.f32.mrb[0].mxu0
      %v476 = vadd.f32 %v300, %v475
      %v477 = vpop.f32.mrb[0].mxu0
      %478 = vmatprep.mubr.f32.mxu0 0.0
      %479 = vmatmul.mubr.f32.gmra.mrb[0].mxu0 %v313
      %v480 = vpop.f32.mrb[0].mxu0
      %v481 = vadd.f32 %v300, %v480
      %v482 = vpop.f32.mrb[0].mxu0
      %483 = vmatprep.mubr.f32.mxu0 0.0
      %484 = vmatmul.mubr.f32.gmra.mrb[0].mxu0 %v316
      %v485 = vpop.f32.mrb[0].mxu0
      %v486 = vadd.f32 %v300, %v485
      %v487 = vpop.f32.mrb[0].mxu0
      %488 = vmatprep.mubr.f32.mxu0 0.0
      %489 = vmatmul.mubr.f32.gmra.mrb[0].mxu0 %v319
      %v490 = vpop.f32.mrb[0].mxu0
      %v491 = vadd.f32 %v300, %v490
      %v492 = vpop.f32.mrb[0].mxu0
      %493 = vmatprep.mubr.f32.mxu0 0.0
      %494 = vmatmul.mubr.f32.gmra.mrb[0].mxu0 %v322
      %v495 = vpop.f32.mrb[0].mxu0
      %v496 = vadd.f32 %v300, %v495
      %v497 = vpop.f32.mrb[0].mxu0
      %498 = vmatprep.mubr.f32.mxu0 0.0
      %499 = vmatmul.mubr.f32.gmra.mrb[0].mxu0 %v325
      %v500 = vpop.f32.mrb[0].mxu0
      %v501 = vadd.f32 %v300, %v500
      %v502 = vpop.f32.mrb[0].mxu0
      %503 = vmatprep.mubr.f32.mxu0 0.0
      %504 = vmatmul.mubr.f32.gmra.mrb[0].mxu0 %v328
      %v505 = vpop.f32.mrb[0].mxu0
      %v506 = vadd.f32 %v300, %v505
      %v507 = vpop.f32.mrb[0].mxu0
      %508 = vmatprep.mubr.f32.mxu0 0.0
      %509 = vmatmul.mubr.f32.gmra.mrb[0].mxu0 %v331
      %v510 = vpop.f32.mrb[0].mxu0
      %v511 = vadd.f32 %v300, %v510
      %v512 = vpop.f32.mrb[0].mxu0
      %513 = vmatprep.mubr.f32.mxu0 0.0
      %514 = vmatmul.mubr.f32.gmra.mrb[0].mxu0 %v334
      %v515 = vpop.f32.mrb[0].mxu0
      %v516 = vadd.f32 %v300, %v515
      %v517 = vpop.f32.mrb[0].mxu0
      %518 = vmatprep.mubr.f32.mxu0 0.0
      %519 = vmatmul.mubr.f32.gmra.mrb[0].mxu0 %v337
      %v520 = vpop.f32.mrb[0].mxu0
      %v521 = vadd.f32 %v300, %v520
      %v522 = vpop.f32.mrb[0].mxu0
      %523 = vmatprep.mubr.f32.mxu0 0.0
      %524 = vmatmul.mubr.f32.gmra.mrb[0].mxu0 %v340
      %v525 = vpop.f32.mrb[0].mxu0
      %v526 = vadd.f32 %v300, %v525
      %v527 = vpop.f32.mrb[0].mxu0
      %528 = vmatprep.mubr.f32.mxu0 0.0
      %529 = vmatmul.mubr.f32.gmra.mrb[0].mxu0 %v343
      %v530 = vpop.f32.mrb[0].mxu0
      %v531 = vadd.f32 %v300, %v530
      %v532 = vpop.f32.mrb[0].mxu0
      %533 = vmatprep.mubr.f32.mxu0 0.0
      %534 = vmatmul.mubr.f32.gmra.mrb[0].mxu0 %v346
      %v535 = vpop.f32.mrb[0].mxu0
      %v536 = vadd.f32 %v300, %v535
      %v537 = vpop.f32.mrb[0].mxu0
      %538 = vmatprep.mubr.f32.mxu0 0.0
      %539 = vmatmul.mubr.f32.gmra.mrb[0].mxu0 %v349
      %v540 = vpop.f32.mrb[0].mxu0
      %v541 = vadd.f32 %v300, %v540
      %v542 = vpop.f32.mrb[0].mxu0
      %543 = vmatprep.mubr.f32.mxu0 0.0
      %544 = vmatmul.mubr.f32.gmra.mrb[0].mxu0 %v352
      %v545 = vpop.f32.mrb[0].mxu0
      %v546 = vadd.f32 %v300, %v545
      %v547 = vpop.f32.mrb[0].mxu0
      %548 = vmatprep.mubr.f32.mxu0 0.0
      %549 = vmatmul.mubr.f32.gmra.mrb[0].mxu0 %v355
      %v550 = vpop.f32.mrb[0].mxu0
      %v551 = vadd.f32 %v300, %v550
      %v552 = vpop.f32.mrb[0].mxu0
      %553 = vmatprep.mubr.f32.mxu0 0.0
      %554 = vmatmul.mubr.f32.gmra.mrb[0].mxu0 %v358
      %v555 = vpop.f32.mrb[0].mxu0
      %v556 = vadd.f32 %v300, %v555
      %v557 = vpop.f32.mrb[0].mxu0
      %558 = vmatprep.mubr.f32.mxu0 0.0
      %559 = vmatmul.mubr.f32.gmra.mrb[0].mxu0 %v361
      %v560 = vpop.f32.mrb[0].mxu0
      %v561 = vadd.f32 %v300, %v560
      %v562 = vpop.f32.mrb[0].mxu0
      %563 = vmatprep.mubr.f32.mxu0 0.0
      %564 = vmatmul.mubr.f32.gmra.mrb[0].mxu0 %v364
      %v565 = vpop.f32.mrb[0].mxu0
      %v566 = vadd.f32 %v300, %v565
      %v567 = vpop.f32.mrb[0].mxu0
      %568 = vmatprep.mubr.f32.mxu0 0.0
      %569 = vmatmul.mubr.f32.gmra.mrb[0].mxu0 %v367
      %v570 = vpop.f32.mrb[0].mxu0
      %v571 = vadd.f32 %v300, %v570
      %v572 = vpop.f32.mrb[0].mxu0
      %573 = vmatprep.mubr.f32.mxu0 0.0
      %574 = vmatmul.mubr.f32.gmra.mrb[0].mxu0 %v370
      %v575 = vpop.f32.mrb[0].mxu0
      %v576 = vadd.f32 %v300, %v575
      %v577 = vpop.f32.mrb[0].mxu0
      %578 = vmatprep.mubr.f32.mxu0 0.0
      %579 = vmatmul.mubr.f32.gmra.mrb[0].mxu0 %v373
      %v580 = vpop.f32.mrb[0].mxu0
      %v581 = vadd.f32 %v300, %v580
      %v582 = vpop.f32.mrb[0].mxu0
      %583 = vmatprep.mubr.f32.mxu0 0.0
      %584 = vmatmul.mubr.f32.gmra.mrb[0].mxu0 %v376
      %v585 = vpop.f32.mrb[0].mxu0
      %v586 = vadd.f32 %v300, %v585
      %v587 = vpop.f32.mrb[0].mxu0
      %588 = vmatprep.mubr.f32.mxu0 0.0
      %589 = vmatmul.mubr.f32.gmra.mrb[0].mxu0 %v379
      %v590 = vpop.f32.mrb[0].mxu0
      %v591 = vadd.f32 %v300, %v590
      %v592 = vpop.f32.mrb[0].mxu0
      %593 = vmatprep.mubr.f32.mxu0 0.0
      %594 = vmatmul.mubr.f32.gmra.mrb[0].mxu0 %v382
      %v595 = vpop.f32.mrb[0].mxu0
      %v596 = vadd.f32 %v300, %v595
      %v597 = vpop.f32.mrb[0].mxu0
      %598 = vmatprep.mubr.f32.mxu0 0.0
      %599 = vmatmul.mubr.f32.gmra.mrb[0].mxu0 %v385
      %v600 = vpop.f32.mrb[0].mxu0
      %v601 = vadd.f32 %v300, %v600
      %v602 = vpop.f32.mrb[0].mxu0
      %603 = vmatprep.mubr.f32.mxu0 0.0
      %604 = vmatmul.mubr.f32.gmra.mrb[0].mxu0 %v388
      %v605 = vpop.f32.mrb[0].mxu0
      %v606 = vadd.f32 %v300, %v605
      %v607 = vpop.f32.mrb[0].mxu0
      %608 = vmatprep.mubr.f32.mxu0 0.0
      %609 = vmatmul.mubr.f32.gmra.mrb[0].mxu0 %v391
      %v610 = vpop.f32.mrb[0].mxu0
      %v611 = vadd.f32 %v300, %v610
      %v612 = vpop.f32.mrb[0].mxu0
      %613 = vmatprep.mubr.f32.mxu0 0.0
      %614 = vmatmul.mubr.f32.gmra.mrb[0].mxu0 %v394
      %v615 = vpop.f32.mrb[0].mxu0
      %v616 = vadd.f32 %v300, %v615
      %v617 = vpop.f32.mrb[0].mxu0
      %618 = vmatprep.mubr.f32.mxu0 0.0
      %619 = vmatmul.mubr.f32.gmra.mrb[0].mxu0 %v397
      %v620 = vpop.f32.mrb[0].mxu0
      %v621 = vadd.f32 %v300, %v620
      %v622 = vpop.f32.mrb[0].mxu0
      %623 = vdwg.mxu0
      %v624 = vmax.f32 %v466, 0.0
      %v625 = vmax.f32 %v471, 0.0
      %v626 = vmax.f32 %v476, 0.0
      %v627 = vmax.f32 %v481, 0.0
      %v628 = vmax.f32 %v486, 0.0
      %v629 = vmax.f32 %v491, 0.0
      %v630 = vmax.f32 %v496, 0.0
      %v631 = vmax.f32 %v501, 0.0
      %v632 = vmax.f32 %v506, 0.0
      %v633 = vmax.f32 %v511, 0.0
      %v634 = vmax.f32 %v516, 0.0
      %v635 = vmax.f32 %v521, 0.0
      %v636 = vmax.f32 %v526, 0.0
      %v637 = vmax.f32 %v531, 0.0
      %v638 = vmax.f32 %v536, 0.0
      %v639 = vmax.f32 %v541, 0.0
      %v640 = vmax.f32 %v546, 0.0
      %v641 = vmax.f32 %v551, 0.0
      %v642 = vmax.f32 %v556, 0.0
      %v643 = vmax.f32 %v561, 0.0
      %v644 = vmax.f32 %v566, 0.0
      %v645 = vmax.f32 %v571, 0.0
      %v646 = vmax.f32 %v576, 0.0
      %v647 = vmax.f32 %v581, 0.0
      %v648 = vmax.f32 %v586, 0.0
      %v649 = vmax.f32 %v591, 0.0
      %v650 = vmax.f32 %v596, 0.0
      %v651 = vmax.f32 %v601, 0.0
      %v652 = vmax.f32 %v606, 0.0
      %v653 = vmax.f32 %v611, 0.0
      %v654 = vmax.f32 %v616, 0.0
      %v655 = vmax.f32 %v621, 0.0
      %v656 = vld [vmem:[%s3] sm:$0xff]
      %v658 = vsel %vm302, %v656, 0
      %v661 = vsel %vm302, %v624, 0
      %v664 = vsel %vm302, %v625, 0
      %v667 = vsel %vm302, %v626, 0
      %v670 = vsel %vm302, %v627, 0
      %v673 = vsel %vm302, %v628, 0
      %v676 = vsel %vm302, %v629, 0
      %v679 = vsel %vm302, %v630, 0
      %v682 = vsel %vm302, %v631, 0
      %v685 = vsel %vm302, %v632, 0
      %v688 = vsel %vm302, %v633, 0
      %v691 = vsel %vm302, %v634, 0
      %v694 = vsel %vm302, %v635, 0
      %v697 = vsel %vm302, %v636, 0
      %v700 = vsel %vm302, %v637, 0
      %v703 = vsel %vm302, %v638, 0
      %v706 = vsel %vm302, %v639, 0
      %v709 = vsel %vm302, %v640, 0
      %v712 = vsel %vm302, %v641, 0
      %v715 = vsel %vm302, %v642, 0
      %v718 = vsel %vm302, %v643, 0
      %v721 = vsel %vm302, %v644, 0
      %v724 = vsel %vm302, %v645, 0
      %v727 = vsel %vm302, %v646, 0
      %v730 = vsel %vm302, %v647, 0
      %v733 = vsel %vm302, %v648, 0
      %v736 = vsel %vm302, %v649, 0
      %v739 = vsel %vm302, %v650, 0
      %v742 = vsel %vm302, %v651, 0
      %v745 = vsel %vm302, %v652, 0
      %v748 = vsel %vm302, %v653, 0
      %v751 = vsel %vm302, %v654, 0
      %v754 = vsel %vm302, %v655, 0
      %756 = vmatprep.subr.mxu0 0.0
      %757 = vmatpush1.xpose.msra.mxu0 %v661
      %758 = vmatprep.subr.mxu0 0.0
      %759 = vmatpush1.xpose.msra.mxu0 %v664
      %760 = vmatprep.subr.mxu0 0.0
      %761 = vmatpush1.xpose.msra.mxu0 %v667
      %762 = vmatprep.subr.mxu0 0.0
      %763 = vmatpush1.xpose.msra.mxu0 %v670
      %764 = vmatprep.subr.mxu0 0.0
      %765 = vmatpush1.xpose.msra.mxu0 %v673
      %766 = vmatprep.subr.mxu0 0.0
      %767 = vmatpush1.xpose.msra.mxu0 %v676
      %768 = vmatprep.subr.mxu0 0.0
      %769 = vmatpush1.xpose.msra.mxu0 %v679
      %770 = vmatprep.subr.mxu0 0.0
      %771 = vmatpush1.xpose.msra.mxu0 %v682
      %772 = vmatprep.subr.mxu0 0.0
      %773 = vmatpush1.xpose.msra.mxu0 %v685
      %774 = vmatprep.subr.mxu0 0.0
      %775 = vmatpush1.xpose.msra.mxu0 %v688
      %776 = vmatprep.subr.mxu0 0.0
      %777 = vmatpush1.xpose.msra.mxu0 %v691
      %778 = vmatprep.subr.mxu0 0.0
      %779 = vmatpush1.xpose.msra.mxu0 %v694
      %780 = vmatprep.subr.mxu0 0.0
      %781 = vmatpush1.xpose.msra.mxu0 %v697
      %782 = vmatprep.subr.mxu0 0.0
      %783 = vmatpush1.xpose.msra.mxu0 %v700
      %784 = vmatprep.subr.mxu0 0.0
      %785 = vmatpush1.xpose.msra.mxu0 %v703
      %786 = vmatprep.subr.mxu0 0.0
      %787 = vmatpush1.xpose.msra.mxu0 %v706
      %788 = vmatprep.subr.mxu0 0.0
      %789 = vmatpush1.xpose.msra.mxu0 %v709
      %790 = vmatprep.subr.mxu0 0.0
      %791 = vmatpush1.xpose.msra.mxu0 %v712
      %792 = vmatprep.subr.mxu0 0.0
      %793 = vmatpush1.xpose.msra.mxu0 %v715
      %794 = vmatprep.subr.mxu0 0.0
      %795 = vmatpush1.xpose.msra.mxu0 %v718
      %796 = vmatprep.subr.mxu0 0.0
      %797 = vmatpush1.xpose.msra.mxu0 %v721
      %798 = vmatprep.subr.mxu0 0.0
      %799 = vmatpush1.xpose.msra.mxu0 %v724
      %800 = vmatprep.subr.mxu0 0.0
      %801 = vmatpush1.xpose.msra.mxu0 %v727
      %802 = vmatprep.subr.mxu0 0.0
      %803 = vmatpush1.xpose.msra.mxu0 %v730
      %804 = vmatprep.subr.mxu0 0.0
      %805 = vmatpush1.xpose.msra.mxu0 %v733
      %806 = vmatprep.subr.mxu0 0.0
      %807 = vmatpush1.xpose.msra.mxu0 %v736
      %808 = vmatprep.subr.mxu0 0.0
      %809 = vmatpush1.xpose.msra.mxu0 %v739
      %810 = vmatprep.subr.mxu0 0.0
      %811 = vmatpush1.xpose.msra.mxu0 %v742
      %812 = vmatprep.subr.mxu0 0.0
      %813 = vmatpush1.xpose.msra.mxu0 %v745
      %814 = vmatprep.subr.mxu0 0.0
      %815 = vmatpush1.xpose.msra.mxu0 %v748
      %816 = vmatprep.subr.mxu0 0.0
      %817 = vmatpush1.xpose.msra.mxu0 %v751
      %818 = vmatprep.subr.mxu0 0.0
      %819 = vmatpush1.xpose.msra.mxu0 %v754
      %820 = vmatprep.mubr.f32.mxu0 0.0
      %821 = vmatmul.mubr.f32.gmra.mrb[0].mxu0 %v658
      %v822 = vpop.f32.mrb[0].mxu0
      %v823 = vadd.f32 0.0, %v822
      %v824 = vpop.f32.mrb[0].mxu0
      %v825 = vadd.f32 0.0, %v824
      %826 = vdwg.mxu0
      %s827 = sld [smem:[#allocation2]]
      %v828 = vstv %s827
      %v829 = vadd.f32 %v823, %v828
      %v830 = vadd.f32 %v825, %v828
      %v833 = vcombine.low %v829, %v830
      %v835 = vunpack.c.l.s4 1966171168
      %v836 = vunpack.c.0.s8 %v835
      %v837 = vlaneseq
      %v838 = vshrl.u32 %v837, 7
      %v839 = vsub.s32 %v836, %v838
      %v840 = vrot.slane %v833, %v839
      %v842 = vunpack.c.l.s4 1966171168
      %v843 = vunpack.c.0.s8 %v842
      %v844 = vlaneseq
      %v845 = vshrl.u32 %v844, 7
      %v846 = vsub.s32 %v843, %v845
      %v847 = vrot.slane %v840, %v846
      %v849 = vlaneseq
      %vm850 = vcmp.ge.s32.totalorder %v849, 0
      %vm851 = vcmp.lt.s32.totalorder %v849, 256
      %vm852 = vmand %vm850, %vm851
      %853 = vst.msk [vmem:[%s225] sm:$0x3] %vm852, %v847
      %s854 = smul.u32 2, %s17
      %p855 = scmp.lt.s32.totalorder %s854, 3
      %s856 = scalar_select %p855, %s854, 3
      %s857 = scalar_lea.vmem %s5, %s856
      // Predicated region
      $region41: #{output_net_forward.1} parent=39 // pred_check
        %p858 = pneg %p145
      $region42: #{output_net_forward.1} parent=39 // pred_check_branch
        %860 = sbr.rel (%p858) target = $region44
      $region43: #{output_net_forward.1} parent=39 // pred_region
        %s861 = smul.u32 2, %s17
      $region44: #{output_net_forward.1} parent=39 // pred_fallthru
        _
    $region40: #{output_net_forward.1} parent=5 // pred_fallthru
      _
    %p862 = scmp.le.s32.totalorder 2, %s12
    // Predicated region
    $region45: #{output_net_forward.1} parent=5 // pred_check
      %p863 = pneg %p862
    $region46: #{output_net_forward.1} parent=5 // pred_check_branch
      %865 = sbr.rel (%p863) target = $region48
    $region47: #{output_net_forward.1} parent=5 // pred_region
      %s866 = ssub.s32 %s12, 2
      // Predicated region
      $region49: #{output_net_forward.1} parent=47 // pred_check
        %p867 = pneg %p151
      $region50: #{output_net_forward.1} parent=47 // pred_check_branch
        %869 = sbr.rel (%p867) target = $region52
      $region51: #{output_net_forward.1} parent=47 // pred_region
        %s870 = smul.u32 2, %s18
        %p871 = scmp.lt.s32.totalorder %s870, 3
        %s872 = scalar_select %p871, %s870, 3
        %s873 = scalar_lea.vmem %s5, %s872
      $region52: #{output_net_forward.1} parent=47 // pred_fallthru
        _
    $region48: #{output_net_forward.1} parent=5 // pred_fallthru
      _
  $region6: #{output_net_forward.1} parent=0 // loop_footer
    %s16 = sadd.s32 1, %s12
  $region7: #{output_net_forward.1} parent=0 // loop_footer_branch
    %11 = sbr.rel target = $region3
  $region8: #{output_net_forward.1} parent=0 // loop_exit
    _

</llo_original>
